<compile_context>
chip_gen: v6e
topology: v6e:2x2x1
jax: 0.10.0
libtpu: 0.0.40
codegen_flags: <defaults>
</compile_context>

<pallas_src>
import jax
import jax.numpy as jnp
from jax import lax
from jax.experimental import pallas as pl
from jax.experimental.pallas import tpu as pltpu
import numpy as np

INPUT_SIZE = 10
HIDDEN_SIZE = 64
OUTPUT_SIZE = 1

H_PAD = 128      # lane-dense hidden width
OUT_PAD = 128    # lane-dense output width (sliced to OUTPUT_SIZE in the wrapper)
T_CHUNK = 4      # timesteps per grid step (time-chunk tiling / pipelining unit)


def rnn_kernel(xh_ref, len_ref, whh_ref, wout_ref, bout_ref, out_ref, h_ref):
    """One time-chunk of the recurrence per grid step.

    xh_ref:  (T_CHUNK, Bp, H_PAD) bf16   precomputed x @ W_xh + b_hh for this chunk
    len_ref: (Bp, 1) int32               valid lengths (0 for padded batch rows)
    whh_ref: (H_PAD, H_PAD) bf16         W_hh (transposed vs torch, zero-padded)
    wout_ref:(H_PAD, OUT_PAD) f32        final Linear weight (transposed, zero-padded)
    bout_ref:(1, OUT_PAD) f32            final Linear bias (zero-padded)
    out_ref: (Bp, OUT_PAD) f32           lane-dense output (written on last chunk)
    h_ref:   (Bp, H_PAD) f32 scratch     hidden state, persists across grid steps
    """
    t_chunk = xh_ref.shape[0]
    chunk = pl.program_id(0)

    @pl.when(chunk == 0)
    def _():
        h_ref[...] = jnp.zeros_like(h_ref)

    # Hoisted loads: recurrent weight (bf16) and length mask live in vregs for the loop.
    whh = whh_ref[...]            # (H_PAD, H_PAD) bf16
    lens = len_ref[...]           # (Bp, 1) int32
    t0 = chunk * t_chunk

    def step(s, h):
        xh_t = xh_ref[s].astype(jnp.float32)                       # (Bp, H_PAD) f32 add
        hh = jnp.dot(h.astype(jnp.bfloat16), whh,                  # bf16 MXU, f32 acc
                     preferred_element_type=jnp.float32)
        new_h = jnp.tanh(xh_t + hh)                                 # f32 VPU/EUP
        # Freeze rows whose sequence has already ended (reproduces stopping the
        # recurrence at seq_lengths[b]; also discards b_hh added past the length).
        return jnp.where(t0 + s < lens, new_h, h)

    h_ref[...] = lax.fori_loop(0, t_chunk, step, h_ref[...], unroll=True)

    @pl.when(chunk == pl.num_programs(0) - 1)
    def _():
        out_ref[...] = (jnp.dot(h_ref[...], wout_ref[...],
                                preferred_element_type=jnp.float32)
                        + bout_ref[...])


def sequence_model_forward(x_tbd, seq_lengths, params, t_chunk=T_CHUNK):
    """x_tbd: (T, B, INPUT_SIZE) f32 time-major padded; seq_lengths: (B,) int.

    Returns (B, OUTPUT_SIZE) f32, matching PyTorch SequenceModel.forward (up to bf16
    rounding of the recurrent MXU operands; accumulation stays f32).
    """
    T, B, _ = x_tbd.shape
    wxh, whh, bhh, wout, bout = params

    Bp = max(8, ((B + 7) // 8) * 8)         # sublane-dense batch
    n_chunks = pl.cdiv(T, t_chunk)
    Tp = n_chunks * t_chunk

    # Input projection hoisted OUT of the kernel: embarrassingly parallel, off the
    # serial path, handled fine by XLA. Stored lane-dense and in bf16 for the kernel.
    xh = jnp.einsum('tbi,ih->tbh', x_tbd, wxh) + bhh                     # (T, B, H) f32
    xh_p = jnp.zeros((Tp, Bp, H_PAD), jnp.bfloat16)
    xh_p = xh_p.at[:T, :B, :HIDDEN_SIZE].set(xh.astype(jnp.bfloat16))

    # Padded batch rows get length 0 -> their hidden state stays exactly 0.
    lens = jnp.zeros((Bp, 1), jnp.int32).at[:B, 0].set(seq_lengths.astype(jnp.int32))

    # Zero-padded weights (mathematically exact: zero rows/cols contribute nothing).
    whh_p = jnp.zeros((H_PAD, H_PAD), jnp.bfloat16)
    whh_p = whh_p.at[:HIDDEN_SIZE, :HIDDEN_SIZE].set(whh.astype(jnp.bfloat16))
    wout_p = jnp.zeros((H_PAD, OUT_PAD), jnp.float32).at[:HIDDEN_SIZE, :OUTPUT_SIZE].set(wout)
    bout_p = jnp.zeros((1, OUT_PAD), jnp.float32).at[:, :OUTPUT_SIZE].set(bout)

    grid_spec = pltpu.PrefetchScalarGridSpec(
        num_scalar_prefetch=0,
        grid=(n_chunks,),
        in_specs=[
            pl.BlockSpec((t_chunk, Bp, H_PAD), lambda c: (c, 0, 0)),   # xh: chunk c
            pl.BlockSpec((Bp, 1), lambda c: (0, 0)),                   # lens (resident)
            pl.BlockSpec((H_PAD, H_PAD), lambda c: (0, 0)),            # W_hh (resident)
            pl.BlockSpec((H_PAD, OUT_PAD), lambda c: (0, 0)),          # W_out (resident)
            pl.BlockSpec((1, OUT_PAD), lambda c: (0, 0)),              # b_out (resident)
        ],
        out_specs=pl.BlockSpec((Bp, OUT_PAD), lambda c: (0, 0)),       # output (resident)
        scratch_shapes=[pltpu.VMEM((Bp, H_PAD), jnp.float32)],         # hidden state
    )

    out_p = pl.pallas_call(
        rnn_kernel,
        out_shape=jax.ShapeDtypeStruct((Bp, OUT_PAD), jnp.float32),
        grid_spec=grid_spec,
        compiler_params=pltpu.CompilerParams(
            dimension_semantics=("arbitrary",),            # time chunks are sequential
            vmem_limit_bytes=32 * 1024 * 1024,             # explicit budget (v5e default is 16 MiB)
        ),
    )(xh_p, lens, whh_p, wout_p, bout_p)

    return out_p[:B, :OUTPUT_SIZE]


def reference_forward(x_tbd, seq_lengths, params):
    """Pure-JAX f32 reference mirroring the PyTorch loop semantics (unpadded)."""
    wxh, whh, bhh, wout, bout = params
    T, B, _ = x_tbd.shape
    lens = seq_lengths.astype(jnp.int32).reshape(B, 1)
    h = jnp.zeros((B, HIDDEN_SIZE), jnp.float32)
    for t in range(T):
        new_h = jnp.tanh(x_tbd[t] @ wxh + h @ whh + bhh)
        h = jnp.where(t < lens, new_h, h)
    return h @ wout + bout


def init_params(key):
    """Deterministic init matching torch.nn.Linear defaults (U[-1/sqrt(fan_in), ...])."""
    k = jax.random.split(key, 5)
    bnd_xh = 1.0 / np.sqrt(INPUT_SIZE)
    bnd_hh = 1.0 / np.sqrt(HIDDEN_SIZE)
    bnd_out = 1.0 / np.sqrt(HIDDEN_SIZE)
    wxh = jax.random.uniform(k[0], (INPUT_SIZE, HIDDEN_SIZE), jnp.float32, -bnd_xh, bnd_xh)
    whh = jax.random.uniform(k[1], (HIDDEN_SIZE, HIDDEN_SIZE), jnp.float32, -bnd_hh, bnd_hh)
    bhh = jax.random.uniform(k[2], (1, HIDDEN_SIZE), jnp.float32, -bnd_hh, bnd_hh)
    wout = jax.random.uniform(k[3], (HIDDEN_SIZE, OUTPUT_SIZE), jnp.float32, -bnd_out, bnd_out)
    bout = jax.random.uniform(k[4], (1, OUTPUT_SIZE), jnp.float32, -bnd_out, bnd_out)
    return wxh, whh, bhh, wout, bout


if __name__ == "__main__":
    key = jax.random.PRNGKey(0)
    kp, kx = jax.random.split(key)

    B, T = 4, 8  # small batch of padded sequences
    params = init_params(kp)

    # Padded input sequences, time-major.
    x_tbd = jax.random.normal(kx, (T, B, INPUT_SIZE), jnp.float32)
    seq_lengths = jnp.array([8, 5, 3, 1], dtype=jnp.int32)

    out = sequence_model_forward(x_tbd, seq_lengths, params)
    out = jax.block_until_ready(out)

    # Tolerance accounts for bf16 MXU operands in the recurrence (accumulation is f32).
    ref = reference_forward(x_tbd, seq_lengths, params)
    np.testing.assert_allclose(np.asarray(out), np.asarray(ref), rtol=2e-2, atol=2e-2)

    print("KERNEL_OK")
</pallas_src>

<mosaic_0001>
module attributes {stable_mosaic.version = 11 : i64} {
  func.func @rnn_kernel(%arg0: i32, %arg1: memref<4x8x128xbf16, #tpu.memory_space<vmem>>, %arg2: memref<8x1xi32, #tpu.memory_space<vmem>>, %arg3: memref<128x128xbf16, #tpu.memory_space<vmem>>, %arg4: memref<128x128xf32, #tpu.memory_space<vmem>>, %arg5: memref<1x128xf32, #tpu.memory_space<vmem>>, %arg6: memref<8x128xf32, #tpu.memory_space<vmem>>, %arg7: memref<8x128xf32, #tpu.memory_space<vmem>>) attributes {dimension_semantics = [#tpu.dimension_semantics<arbitrary>], iteration_bounds = array<i64: 2>, scalar_prefetch = 0 : i64, scratch_operands = 1 : i64, tpu.core_type = #tpu.core_type<tc>, window_params = [{transform_indices = @transform_0, window_bounds = array<i64: 4, 8, 128>}, {pipeline_mode = #tpu.pipeline_mode<synchronous>, transform_indices = @transform_1, window_bounds = array<i64: 8, 1>}, {pipeline_mode = #tpu.pipeline_mode<synchronous>, transform_indices = @transform_2, window_bounds = array<i64: 128, 128>}, {pipeline_mode = #tpu.pipeline_mode<synchronous>, transform_indices = @transform_3, window_bounds = array<i64: 128, 128>}, {pipeline_mode = #tpu.pipeline_mode<synchronous>, transform_indices = @transform_4, window_bounds = array<i64: 1, 128>}, {pipeline_mode = #tpu.pipeline_mode<synchronous>, transform_indices = @transform_5, window_bounds = array<i64: 8, 128>}]} {
    %c0_i32 = arith.constant 0 : i32
    %0 = arith.cmpi eq, %arg0, %c0_i32 : i32
    %1 = arith.extui %0 : i1 to i32
    %c0_i32_0 = arith.constant 0 : i32
    %2 = arith.cmpi ne, %1, %c0_i32_0 : i32
    scf.if %2 {
      %cst_23 = arith.constant 0.000000e+00 : f32
      %67 = vector.broadcast %cst_23 : f32 to vector<8x128xf32>
      %c0_24 = arith.constant 0 : index
      %c0_25 = arith.constant 0 : index
      %68 = vector.load %arg7[%c0_24, %c0_25] : memref<8x128xf32, #tpu.memory_space<vmem>>, vector<8x128xf32>
      tpu.vector_store %arg7[%c0_24, %c0_25], %67 {strides = array<i32>} : memref<8x128xf32, #tpu.memory_space<vmem>>, vector<8x128xf32>,
    } else {
    }
    %c0 = arith.constant 0 : index
    %c0_1 = arith.constant 0 : index
    %3 = vector.load %arg3[%c0, %c0_1] : memref<128x128xbf16, #tpu.memory_space<vmem>>, vector<128x128xbf16>
    %c0_2 = arith.constant 0 : index
    %c0_3 = arith.constant 0 : index
    %4 = vector.load %arg2[%c0_2, %c0_3] : memref<8x1xi32, #tpu.memory_space<vmem>>, vector<8x1xi32>
    %c4_i32 = arith.constant 4 : i32
    %5 = arith.muli %arg0, %c4_i32 : i32
    %c0_4 = arith.constant 0 : index
    %c0_5 = arith.constant 0 : index
    %6 = vector.load %arg7[%c0_4, %c0_5] : memref<8x128xf32, #tpu.memory_space<vmem>>, vector<8x128xf32>
    %c0_i32_6 = arith.constant 0 : i32
    %7 = arith.index_cast %c0_i32_6 : i32 to index
    %c0_7 = arith.constant 0 : index
    %c0_8 = arith.constant 0 : index
    %8 = vector.load %arg1[%7, %c0_7, %c0_8] : memref<4x8x128xbf16, #tpu.memory_space<vmem>>, vector<1x8x128xbf16>
    %9 = vector.shape_cast %8 : vector<1x8x128xbf16> to vector<8x128xbf16>
    %10 = arith.extf %9 : vector<8x128xbf16> to vector<8x128xf32>
    %11 = arith.truncf %6 : vector<8x128xf32> to vector<8x128xbf16>
    %cst = arith.constant dense<0.000000e+00> : vector<8x128xf32>
    %12 = tpu.matmul %11, %3, %cst {dimension_numbers = #tpu.dot_dimension_numbers<[1], [0], [0], [1], [0, 0, 1, 1], [], []>} : vector<8x128xbf16>, vector<128x128xbf16>, vector<8x128xf32> -> vector<8x128xf32>
    %13 = arith.addf %10, %12 : vector<8x128xf32>
    %14 = math.tanh %13 : vector<8x128xf32>
    %15 = arith.addi %5, %c0_i32_6 : i32
    %16 = vector.broadcast %15 : i32 to vector<8x1xi32>
    %17 = arith.cmpi slt, %16, %4 : vector<8x1xi32>
    %18 = vector.shape_cast %17 : vector<8x1xi1> to vector<8x1xi1>
    %19 = vector.broadcast %18 : vector<8x1xi1> to vector<8x128xi1>
    %20 = arith.select %19, %14, %6 : vector<8x128xi1>, vector<8x128xf32>
    %c1_i32 = arith.constant 1 : i32
    %21 = arith.index_cast %c1_i32 : i32 to index
    %c0_9 = arith.constant 0 : index
    %c0_10 = arith.constant 0 : index
    %22 = vector.load %arg1[%21, %c0_9, %c0_10] : memref<4x8x128xbf16, #tpu.memory_space<vmem>>, vector<1x8x128xbf16>
    %23 = vector.shape_cast %22 : vector<1x8x128xbf16> to vector<8x128xbf16>
    %24 = arith.extf %23 : vector<8x128xbf16> to vector<8x128xf32>
    %25 = arith.truncf %20 : vector<8x128xf32> to vector<8x128xbf16>
    %cst_11 = arith.constant dense<0.000000e+00> : vector<8x128xf32>
    %26 = tpu.matmul %25, %3, %cst_11 {dimension_numbers = #tpu.dot_dimension_numbers<[1], [0], [0], [1], [0, 0, 1, 1], [], []>} : vector<8x128xbf16>, vector<128x128xbf16>, vector<8x128xf32> -> vector<8x128xf32>
    %27 = arith.addf %24, %26 : vector<8x128xf32>
    %28 = math.tanh %27 : vector<8x128xf32>
    %29 = arith.addi %5, %c1_i32 : i32
    %30 = vector.broadcast %29 : i32 to vector<8x1xi32>
    %31 = arith.cmpi slt, %30, %4 : vector<8x1xi32>
    %32 = vector.shape_cast %31 : vector<8x1xi1> to vector<8x1xi1>
    %33 = vector.broadcast %32 : vector<8x1xi1> to vector<8x128xi1>
    %34 = arith.select %33, %28, %20 : vector<8x128xi1>, vector<8x128xf32>
    %c2_i32 = arith.constant 2 : i32
    %35 = arith.index_cast %c2_i32 : i32 to index
    %c0_12 = arith.constant 0 : index
    %c0_13 = arith.constant 0 : index
    %36 = vector.load %arg1[%35, %c0_12, %c0_13] : memref<4x8x128xbf16, #tpu.memory_space<vmem>>, vector<1x8x128xbf16>
    %37 = vector.shape_cast %36 : vector<1x8x128xbf16> to vector<8x128xbf16>
    %38 = arith.extf %37 : vector<8x128xbf16> to vector<8x128xf32>
    %39 = arith.truncf %34 : vector<8x128xf32> to vector<8x128xbf16>
    %cst_14 = arith.constant dense<0.000000e+00> : vector<8x128xf32>
    %40 = tpu.matmul %39, %3, %cst_14 {dimension_numbers = #tpu.dot_dimension_numbers<[1], [0], [0], [1], [0, 0, 1, 1], [], []>} : vector<8x128xbf16>, vector<128x128xbf16>, vector<8x128xf32> -> vector<8x128xf32>
    %41 = arith.addf %38, %40 : vector<8x128xf32>
    %42 = math.tanh %41 : vector<8x128xf32>
    %43 = arith.addi %5, %c2_i32 : i32
    %44 = vector.broadcast %43 : i32 to vector<8x1xi32>
    %45 = arith.cmpi slt, %44, %4 : vector<8x1xi32>
    %46 = vector.shape_cast %45 : vector<8x1xi1> to vector<8x1xi1>
    %47 = vector.broadcast %46 : vector<8x1xi1> to vector<8x128xi1>
    %48 = arith.select %47, %42, %34 : vector<8x128xi1>, vector<8x128xf32>
    %c3_i32 = arith.constant 3 : i32
    %49 = arith.index_cast %c3_i32 : i32 to index
    %c0_15 = arith.constant 0 : index
    %c0_16 = arith.constant 0 : index
    %50 = vector.load %arg1[%49, %c0_15, %c0_16] : memref<4x8x128xbf16, #tpu.memory_space<vmem>>, vector<1x8x128xbf16>
    %51 = vector.shape_cast %50 : vector<1x8x128xbf16> to vector<8x128xbf16>
    %52 = arith.extf %51 : vector<8x128xbf16> to vector<8x128xf32>
    %53 = arith.truncf %48 : vector<8x128xf32> to vector<8x128xbf16>
    %cst_17 = arith.constant dense<0.000000e+00> : vector<8x128xf32>
    %54 = tpu.matmul %53, %3, %cst_17 {dimension_numbers = #tpu.dot_dimension_numbers<[1], [0], [0], [1], [0, 0, 1, 1], [], []>} : vector<8x128xbf16>, vector<128x128xbf16>, vector<8x128xf32> -> vector<8x128xf32>
    %55 = arith.addf %52, %54 : vector<8x128xf32>
    %56 = math.tanh %55 : vector<8x128xf32>
    %57 = arith.addi %5, %c3_i32 : i32
    %58 = vector.broadcast %57 : i32 to vector<8x1xi32>
    %59 = arith.cmpi slt, %58, %4 : vector<8x1xi32>
    %60 = vector.shape_cast %59 : vector<8x1xi1> to vector<8x1xi1>
    %61 = vector.broadcast %60 : vector<8x1xi1> to vector<8x128xi1>
    %62 = arith.select %61, %56, %48 : vector<8x128xi1>, vector<8x128xf32>
    %c4_i32_18 = arith.constant 4 : i32
    %c0_19 = arith.constant 0 : index
    %c0_20 = arith.constant 0 : index
    %63 = vector.load %arg7[%c0_19, %c0_20] : memref<8x128xf32, #tpu.memory_space<vmem>>, vector<8x128xf32>
    tpu.vector_store %arg7[%c0_19, %c0_20], %62 {strides = array<i32>} : memref<8x128xf32, #tpu.memory_space<vmem>>, vector<8x128xf32>,
    %c1_i32_21 = arith.constant 1 : i32
    %64 = arith.cmpi eq, %arg0, %c1_i32_21 : i32
    %65 = arith.extui %64 : i1 to i32
    %c0_i32_22 = arith.constant 0 : i32
    %66 = arith.cmpi ne, %65, %c0_i32_22 : i32
    scf.if %66 {
      %c0_23 = arith.constant 0 : index
      %c0_24 = arith.constant 0 : index
      %67 = vector.load %arg7[%c0_23, %c0_24] : memref<8x128xf32, #tpu.memory_space<vmem>>, vector<8x128xf32>
      %c0_25 = arith.constant 0 : index
      %c0_26 = arith.constant 0 : index
      %68 = vector.load %arg4[%c0_25, %c0_26] : memref<128x128xf32, #tpu.memory_space<vmem>>, vector<128x128xf32>
      %cst_27 = arith.constant dense<0.000000e+00> : vector<8x128xf32>
      %69 = tpu.matmul %67, %68, %cst_27 {dimension_numbers = #tpu.dot_dimension_numbers<[1], [0], [0], [1], [0, 0, 1, 1], [], []>} : vector<8x128xf32>, vector<128x128xf32>, vector<8x128xf32> -> vector<8x128xf32>
      %c0_28 = arith.constant 0 : index
      %c0_29 = arith.constant 0 : index
      %70 = vector.load %arg5[%c0_28, %c0_29] : memref<1x128xf32, #tpu.memory_space<vmem>>, vector<1x128xf32>
      %71 = vector.broadcast %70 : vector<1x128xf32> to vector<8x128xf32>
      %72 = arith.addf %69, %71 : vector<8x128xf32>
      %c0_30 = arith.constant 0 : index
      %c0_31 = arith.constant 0 : index
      %73 = vector.load %arg6[%c0_30, %c0_31] : memref<8x128xf32, #tpu.memory_space<vmem>>, vector<8x128xf32>
      tpu.vector_store %arg6[%c0_30, %c0_31], %72 {strides = array<i32>} : memref<8x128xf32, #tpu.memory_space<vmem>>, vector<8x128xf32>,
    } else {
    }
    return
  }
  func.func @transform_0(%arg0: i32) -> (i32, i32, i32) {
    %c0_i32 = arith.constant 0 : i32
    %c0_i32_0 = arith.constant 0 : i32
    %c0_i32_1 = arith.constant 0 : i32
    return %arg0, %c0_i32, %c0_i32_0 : i32, i32, i32
  }
  func.func @transform_1(%arg0: i32) -> (i32, i32) {
    %c0_i32 = arith.constant 0 : i32
    %c0_i32_0 = arith.constant 0 : i32
    %c0_i32_1 = arith.constant 0 : i32
    return %c0_i32, %c0_i32_0 : i32, i32
  }
  func.func @transform_2(%arg0: i32) -> (i32, i32) {
    %c0_i32 = arith.constant 0 : i32
    %c0_i32_0 = arith.constant 0 : i32
    %c0_i32_1 = arith.constant 0 : i32
    return %c0_i32, %c0_i32_0 : i32, i32
  }
  func.func @transform_3(%arg0: i32) -> (i32, i32) {
    %c0_i32 = arith.constant 0 : i32
    %c0_i32_0 = arith.constant 0 : i32
    %c0_i32_1 = arith.constant 0 : i32
    return %c0_i32, %c0_i32_0 : i32, i32
  }
  func.func @transform_4(%arg0: i32) -> (i32, i32) {
    %c0_i32 = arith.constant 0 : i32
    %c0_i32_0 = arith.constant 0 : i32
    %c0_i32_1 = arith.constant 0 : i32
    return %c0_i32, %c0_i32_0 : i32, i32
  }
  func.func @transform_5(%arg0: i32) -> (i32, i32) {
    %c0_i32 = arith.constant 0 : i32
    %c0_i32_0 = arith.constant 0 : i32
    %c0_i32_1 = arith.constant 0 : i32
    return %c0_i32, %c0_i32_0 : i32, i32
  }
}

</mosaic_0001>

<llo_original>
// kernel: tpu_custom_call.1
$region0: #{tpu_custom_call.1}
  #allocation0 [shape = 'u32[]', space=smem, size = 0x4, offset = 0x4, fixed_abs, tag = 'smem constant byte address 0x4 - core index']
  #allocation1 [shape = 'u32[144,128]{1,0:T(1,128)}', space=vmem, size = 0x12000, scoped, tag = 'internal scratch']
  #allocation2 [shape = 'f32[8,128]{1,0:T(8,128)}', space=vmem, size = 0x1000, scoped, tag = 'scratch operand']
  %s0 = inlined_call_operand.hbm [shape: bf16[8,8,128], index: 0, kind: input, shape index: {}]
  %s1 = inlined_call_operand.vmem [shape: s32[8,1], index: 1, kind: input, shape index: {}]
  %s2 = inlined_call_operand.hbm [shape: bf16[128,128], index: 2, kind: input, shape index: {}]
  %s3 = inlined_call_operand.hbm [shape: f32[128,128], index: 3, kind: input, shape index: {}]
  %s4 = inlined_call_operand.vmem [shape: f32[1,128], index: 4, kind: input, shape index: {}]
  %s5 = inlined_call_operand.hbm [shape: f32[8,128], index: 5, kind: output, shape index: {}]
  %s6 = sld [smem:[#allocation0]]
  $region73: #{tpu_custom_call.1} parent=0
    _
  %s8 = ssub.s32 1, %s6
  %s9 = scalar_select 0, %s8, %s6
  $region1: #{tpu_custom_call.1} parent=0
    #allocation3 [shape = 'u8[16384]{0}', space=vmem, size = 0x4000, scoped, tag = 'input window, operand 0']
    #allocation4 [shape = 's32[2]{0}', space=sflag, size = 0x8, scoped, tag = 'scoped memory for tpu_custom_call.1']
    #allocation5 [shape = 's32[2]{0}', space=sflag, size = 0x8, scoped, tag = 'scoped memory for tpu_custom_call.1']
    #allocation6 [shape = 'u8[32768]{0}', space=vmem, size = 0x8000, scoped, tag = 'input window, operand 2, single buffered']
    #allocation7 [shape = 's32[1]{0}', space=sflag, size = 0x4, scoped, tag = 'scoped memory for tpu_custom_call.1']
    #allocation8 [shape = 'u8[65536]{0}', space=vmem, size = 0x10000, scoped, tag = 'input window, operand 3, single buffered']
    #allocation9 [shape = 'u8[4096]{0}', space=vmem, size = 0x1000, scoped, tag = 'output window, operand 0, single buffered']
    %10 = vsyncpa [#allocation4], 0
    %s11 = scalar_lea.sflag [#allocation4], 1
    %12 = vsyncpa %s11, 0
    %13 = vsyncpa [#allocation7], 0
    %14 = vsyncpa [#allocation5], 0
    loop: start=0, step=1, limit=4
    $region2: #{tpu_custom_call.1} parent=1 // loop_pre_header
      _
    $region3: #{tpu_custom_call.1} parent=1 // loop_header
      %s16 = sphi 0, %s20
      %p17 = scmp.ge.s32.totalorder %s16, 4
      %s26 = sphi 0, %s28
      %s29 = sphi 0, %s26
      %s30 = sphi 0, %s29
      %s46 = sphi 0, %s30
      %s50 = sphi 0, %s50
      %s52 = sphi 0, %s50
      %s53 = sphi 0, %s52
      %s67 = sphi 0, %s53
      %s71 = sphi 0, %s71
      %s73 = sphi 0, %s71
      %s74 = sphi 0, %s73
      %s88 = sphi 0, %s74
      %s92 = sphi 0, %s92
      %s94 = sphi 0, %s92
      %s95 = sphi 0, %s94
      %s109 = sphi 0, %s95
      %s113 = sphi 0, %s113
      %s115 = sphi 0, %s113
      %s116 = sphi 0, %s115
      %s130 = sphi 0, %s116
      %s134 = sphi 0, %s134
      %s136 = sphi 0, %s134
      %s137 = sphi 0, %s136
      %s151 = sphi 0, %s137
    $region4: #{tpu_custom_call.1} parent=1 // loop_header_branch
      %19 = sbr.rel (%p17) target = $region8
    $region5: #{tpu_custom_call.1} parent=1 // loop_body
      %s21 = ssub.s32 %s16, 1
      %s22 = ssub.s32 %s16, 2
      %s23 = sadd.s32 %s16, 1
      %s24 = ssub.s32 %s16, %s23
      %p25 = scmp.eq.s32.totalorder %s24, 0
      %s27 = sadd.s32 %s26, 1
      %s28 = scalar_select %p25, %s26, %s27
      %p31 = pneg %p25
      %p32 = scmp.eq.s32.totalorder %s16, 1
      %p33 = por %p31, %p32
      %p34 = scmp.ne.s32.totalorder %s26, %s29
      %p35 = scmp.eq.s32.totalorder %s16, 0
      %p36 = por %p34, %p35
      %p37 = scmp.ne.s32.totalorder %s26, %s29
      %p38 = scmp.eq.s32.totalorder %s21, 1
      %p39 = por %p37, %p38
      %p40 = scmp.ne.s32.totalorder %s29, %s30
      %p41 = scmp.eq.s32.totalorder %s21, 0
      %p42 = por %p40, %p41
      %p43 = scmp.ne.s32.totalorder %s29, %s30
      %p44 = scmp.eq.s32.totalorder %s22, 1
      %p45 = por %p43, %p44
      %p47 = scmp.ne.s32.totalorder %s30, %s46
      %p48 = scmp.eq.s32.totalorder %s22, 0
      %p49 = por %p47, %p48
      %s51 = sadd.s32 %s50, 1
      %p54 = scmp.eq.s32.totalorder %s16, 1
      %p55 = scmp.ne.s32.totalorder %s50, %s52
      %p56 = scmp.eq.s32.totalorder %s16, 0
      %p57 = por %p55, %p56
      %p58 = scmp.ne.s32.totalorder %s50, %s52
      %p59 = scmp.eq.s32.totalorder %s21, 1
      %p60 = por %p58, %p59
      %p61 = scmp.ne.s32.totalorder %s52, %s53
      %p62 = scmp.eq.s32.totalorder %s21, 0
      %p63 = por %p61, %p62
      %p64 = scmp.ne.s32.totalorder %s52, %s53
      %p65 = scmp.eq.s32.totalorder %s22, 1
      %p66 = por %p64, %p65
      %p68 = scmp.ne.s32.totalorder %s53, %s67
      %p69 = scmp.eq.s32.totalorder %s22, 0
      %p70 = por %p68, %p69
      %s72 = sadd.s32 %s71, 1
      %p75 = scmp.eq.s32.totalorder %s16, 1
      %p76 = scmp.ne.s32.totalorder %s71, %s73
      %p77 = scmp.eq.s32.totalorder %s16, 0
      %p78 = por %p76, %p77
      %p79 = scmp.ne.s32.totalorder %s71, %s73
      %p80 = scmp.eq.s32.totalorder %s21, 1
      %p81 = por %p79, %p80
      %p82 = scmp.ne.s32.totalorder %s73, %s74
      %p83 = scmp.eq.s32.totalorder %s21, 0
      %p84 = por %p82, %p83
      %p85 = scmp.ne.s32.totalorder %s73, %s74
      %p86 = scmp.eq.s32.totalorder %s22, 1
      %p87 = por %p85, %p86
      %p89 = scmp.ne.s32.totalorder %s74, %s88
      %p90 = scmp.eq.s32.totalorder %s22, 0
      %p91 = por %p89, %p90
      %s93 = sadd.s32 %s92, 1
      %p96 = scmp.eq.s32.totalorder %s16, 1
      %p97 = scmp.ne.s32.totalorder %s92, %s94
      %p98 = scmp.eq.s32.totalorder %s16, 0
      %p99 = por %p97, %p98
      %p100 = scmp.ne.s32.totalorder %s92, %s94
      %p101 = scmp.eq.s32.totalorder %s21, 1
      %p102 = por %p100, %p101
      %p103 = scmp.ne.s32.totalorder %s94, %s95
      %p104 = scmp.eq.s32.totalorder %s21, 0
      %p105 = por %p103, %p104
      %p106 = scmp.ne.s32.totalorder %s94, %s95
      %p107 = scmp.eq.s32.totalorder %s22, 1
      %p108 = por %p106, %p107
      %p110 = scmp.ne.s32.totalorder %s95, %s109
      %p111 = scmp.eq.s32.totalorder %s22, 0
      %p112 = por %p110, %p111
      %s114 = sadd.s32 %s113, 1
      %p117 = scmp.eq.s32.totalorder %s16, 1
      %p118 = scmp.ne.s32.totalorder %s113, %s115
      %p119 = scmp.eq.s32.totalorder %s16, 0
      %p120 = por %p118, %p119
      %p121 = scmp.ne.s32.totalorder %s113, %s115
      %p122 = scmp.eq.s32.totalorder %s21, 1
      %p123 = por %p121, %p122
      %p124 = scmp.ne.s32.totalorder %s115, %s116
      %p125 = scmp.eq.s32.totalorder %s21, 0
      %p126 = por %p124, %p125
      %p127 = scmp.ne.s32.totalorder %s115, %s116
      %p128 = scmp.eq.s32.totalorder %s22, 1
      %p129 = por %p127, %p128
      %p131 = scmp.ne.s32.totalorder %s116, %s130
      %p132 = scmp.eq.s32.totalorder %s22, 0
      %p133 = por %p131, %p132
      %s135 = sadd.s32 %s134, 1
      %p138 = scmp.eq.s32.totalorder %s16, 1
      %p139 = scmp.ne.s32.totalorder %s134, %s136
      %p140 = scmp.eq.s32.totalorder %s16, 0
      %p141 = por %p139, %p140
      %p142 = scmp.ne.s32.totalorder %s134, %s136
      %p143 = scmp.eq.s32.totalorder %s21, 1
      %p144 = por %p142, %p143
      %p145 = scmp.ne.s32.totalorder %s136, %s137
      %p146 = scmp.eq.s32.totalorder %s21, 0
      %p147 = por %p145, %p146
      %p148 = scmp.ne.s32.totalorder %s136, %s137
      %p149 = scmp.eq.s32.totalorder %s22, 1
      %p150 = por %p148, %p149
      %p152 = scmp.ne.s32.totalorder %s137, %s151
      %p153 = scmp.eq.s32.totalorder %s22, 0
      %p154 = por %p152, %p153
      %p155 = scmp.le.s32.totalorder 1, %s16
      %p156 = scmp.lt.s32.totalorder %s16, 3
      %p157 = pnand %p155, %p156
      %p158 = pneg %p157
      // Predicated region
      $region9: #{tpu_custom_call.1} parent=5 // pred_check
        _
      $region10: #{tpu_custom_call.1} parent=5 // pred_check_branch
        %160 = sbr.rel (%p157) target = $region12
      $region11: #{tpu_custom_call.1} parent=5 // pred_region
        %s161 = ssub.s32 %s16, 1
        // Predicated region
        $region13: #{tpu_custom_call.1} parent=11 // pred_check
          %p162 = pneg %p63
        $region14: #{tpu_custom_call.1} parent=11 // pred_check_branch
          %164 = sbr.rel (%p162) target = $region16
        $region15: #{tpu_custom_call.1} parent=11 // pred_region
          _
        $region16: #{tpu_custom_call.1} parent=11 // pred_fallthru
          _
        // Predicated region
        $region17: #{tpu_custom_call.1} parent=11 // pred_check
          %p165 = pneg %p84
        $region18: #{tpu_custom_call.1} parent=11 // pred_check_branch
          %167 = sbr.rel (%p165) target = $region20
        $region19: #{tpu_custom_call.1} parent=11 // pred_region
          %s169 = ssub.s32 1024, 1024
          %170 = vsyncadd [#allocation7], %s169
          %s171 = sshll.u32 [#allocation6], 4
          %s172 = int_to_ptr.vmem [resolvable:$true] %s171
          %177 = dma.hbm_to_vmem [thread:$0]  %s2, 1024, %s172, [#allocation7], 64, 64, 4
        $region20: #{tpu_custom_call.1} parent=11 // pred_fallthru
          _
        // Predicated region
        $region21: #{tpu_custom_call.1} parent=11 // pred_check
          %p178 = pneg %p105
        $region22: #{tpu_custom_call.1} parent=11 // pred_check_branch
          %180 = sbr.rel (%p178) target = $region24
        $region23: #{tpu_custom_call.1} parent=11 // pred_region
          %s182 = ssub.s32 2048, 2048
          %183 = vsyncadd [#allocation7], %s182
          %s184 = sshll.u32 [#allocation8], 4
          %s185 = int_to_ptr.vmem [resolvable:$true] %s184
          %190 = dma.hbm_to_vmem [thread:$0]  %s3, 2048, %s185, [#allocation7], 128, 128, 8
        $region24: #{tpu_custom_call.1} parent=11 // pred_fallthru
          _
        // Predicated region
        $region25: #{tpu_custom_call.1} parent=11 // pred_check
          %p191 = pneg %p126
        $region26: #{tpu_custom_call.1} parent=11 // pred_check_branch
          %193 = sbr.rel (%p191) target = $region28
        $region27: #{tpu_custom_call.1} parent=11 // pred_region
          _
        $region28: #{tpu_custom_call.1} parent=11 // pred_fallthru
          _
      $region12: #{tpu_custom_call.1} parent=5 // pred_fallthru
        _
      %p194 = scmp.lt.s32.totalorder %s16, 2
      // Predicated region
      $region29: #{tpu_custom_call.1} parent=5 // pred_check
        %p195 = pneg %p194
      $region30: #{tpu_custom_call.1} parent=5 // pred_check_branch
        %197 = sbr.rel (%p195) target = $region32
      $region31: #{tpu_custom_call.1} parent=5 // pred_region
        // Predicated region
        $region33: #{tpu_custom_call.1} parent=31 // pred_check
          %p198 = pneg %p36
        $region34: #{tpu_custom_call.1} parent=31 // pred_check_branch
          %200 = sbr.rel (%p198) target = $region36
        $region35: #{tpu_custom_call.1} parent=31 // pred_region
          %s201 = sand.u32 %s26, 1
          %s202 = scalar_lea.sflag [#allocation4], %s201
          %s203 = sand.u32 %s26, 1
          %s204 = smul.addr %s203, 16
          %s205 = scalar_lea.vmem [#allocation3], %s204
          %s206 = smul.u32 4, %s16
          %s208 = ssub.s32 256, 256
          %209 = vsyncadd %s202, %s208
          %s210 = smul.addr %s206, 64
          %s211 = scalar_lea.hbm %s0, %s210
          %s212 = sshll.u32 %s205, 4
          %s213 = int_to_ptr.vmem [resolvable:$true] %s212
          %218 = dma.hbm_to_vmem [thread:$0]  %s211, 256, %s213, %s202, 64, 64, 4
        $region36: #{tpu_custom_call.1} parent=31 // pred_fallthru
          _
      $region32: #{tpu_custom_call.1} parent=5 // pred_fallthru
        _
      %p219 = scmp.le.s32.totalorder 1, %s16
      %p220 = scmp.lt.s32.totalorder %s16, 3
      %p221 = pnand %p219, %p220
      %p222 = pneg %p221
      // Predicated region
      $region37: #{tpu_custom_call.1} parent=5 // pred_check
        _
      $region38: #{tpu_custom_call.1} parent=5 // pred_check_branch
        %224 = sbr.rel (%p221) target = $region40
      $region39: #{tpu_custom_call.1} parent=5 // pred_region
        %s225 = ssub.s32 %s16, 1
        %s226 = sand.u32 %s29, 1
        %s227 = scalar_lea.sflag [#allocation4], %s226
        %s228 = sand.u32 %s29, 1
        %s229 = smul.addr %s228, 16
        %s230 = scalar_lea.vmem [#allocation3], %s229
        // Predicated region
        $region41: #{tpu_custom_call.1} parent=39 // pred_check
          %p231 = pneg %p42
        $region42: #{tpu_custom_call.1} parent=39 // pred_check_branch
          %233 = sbr.rel (%p231) target = $region44
        $region43: #{tpu_custom_call.1} parent=39 // pred_region
          %234 = dma.done %s227, 256
        $region44: #{tpu_custom_call.1} parent=39 // pred_fallthru
          _
        // Predicated region
        $region45: #{tpu_custom_call.1} parent=39 // pred_check
          %p235 = pneg %p84
        $region46: #{tpu_custom_call.1} parent=39 // pred_check_branch
          %237 = sbr.rel (%p235) target = $region48
        $region47: #{tpu_custom_call.1} parent=39 // pred_region
          %238 = dma.done [#allocation7], 1024
        $region48: #{tpu_custom_call.1} parent=39 // pred_fallthru
          _
        // Predicated region
        $region49: #{tpu_custom_call.1} parent=39 // pred_check
          %p239 = pneg %p105
        $region50: #{tpu_custom_call.1} parent=39 // pred_check_branch
          %241 = sbr.rel (%p239) target = $region52
        $region51: #{tpu_custom_call.1} parent=39 // pred_region
          %242 = dma.done [#allocation7], 2048
        $region52: #{tpu_custom_call.1} parent=39 // pred_fallthru
          _
        %s243 = sand.u32 %s29, 1
        %s244 = scalar_lea.sflag [#allocation4], %s243
        %s245 = sand.u32 %s29, 1
        %s246 = smul.addr %s245, 16
        %s247 = scalar_lea.vmem [#allocation3], %s246
        %p248 = pneg %p42
        %p249 = pneg %p39
        %p250 = pneg %p63
        %p251 = pneg %p60
        %p252 = pneg %p84
        %p253 = pneg %p81
        %p254 = pneg %p105
        %p255 = pneg %p102
        %p256 = pneg %p126
        %p257 = pneg %p123
        %p258 = pneg %p147
        %p259 = pneg %p144
        %s260 = smul.u32 4, %s21
        %p262 = scmp.eq.s32.totalorder %s21, 0
        // Predicated region
        $region53: #{tpu_custom_call.1} parent=39 // pred_check
          %p263 = pneg %p262
        $region54: #{tpu_custom_call.1} parent=39 // pred_check_branch
          %265 = sbr.rel (%p263) target = $region56
        $region55: #{tpu_custom_call.1} parent=39 // pred_region
          %266 = vst [vmem:[#allocation2] sm:$0xff] 0.0
        $region56: #{tpu_custom_call.1} parent=39 // pred_fallthru
          _
        %v267 = vld [vmem:[#allocation6] sm:$0xf]
        %v268 = vld [vmem:[#allocation6 + $0x4] sm:$0xf]
        %v269 = vld [vmem:[#allocation6 + $0x8] sm:$0xf]
        %v270 = vld [vmem:[#allocation6 + $0xc] sm:$0xf]
        %v271 = vld [vmem:[#allocation6 + $0x10] sm:$0xf]
        %v272 = vld [vmem:[#allocation6 + $0x14] sm:$0xf]
        %v273 = vld [vmem:[#allocation6 + $0x18] sm:$0xf]
        %v274 = vld [vmem:[#allocation6 + $0x1c] sm:$0xf]
        %v275 = vld [vmem:[#allocation6 + $0x20] sm:$0xf]
        %v276 = vld [vmem:[#allocation6 + $0x24] sm:$0xf]
        %v277 = vld [vmem:[#allocation6 + $0x28] sm:$0xf]
        %v278 = vld [vmem:[#allocation6 + $0x2c] sm:$0xf]
        %v279 = vld [vmem:[#allocation6 + $0x30] sm:$0xf]
        %v280 = vld [vmem:[#allocation6 + $0x34] sm:$0xf]
        %v281 = vld [vmem:[#allocation6 + $0x38] sm:$0xf]
        %v282 = vld [vmem:[#allocation6 + $0x3c] sm:$0xf]
        %v283 = vld [vmem:[%s1] sm:$0xff]
        %s284 = smul.u32 %s21, 4
        %v285 = vld [vmem:[#allocation2] sm:$0xff]
        %v286 = vld [vmem:[%s230] sm:$0xf]
        %v287 = vunpack.c.l.bf16 %v286
        %v288 = vpack.c.bf16 %v285, %v285
        %v305 = vunpack.c.l.b16 %v267
        %v306 = vunpack.c.l.b16 %v268
        %v307 = vunpack.c.l.b16 %v269
        %v308 = vunpack.c.l.b16 %v270
        %v309 = vunpack.c.l.b16 %v271
        %v310 = vunpack.c.l.b16 %v272
        %v311 = vunpack.c.l.b16 %v273
        %v312 = vunpack.c.l.b16 %v274
        %v313 = vunpack.c.l.b16 %v275
        %v314 = vunpack.c.l.b16 %v276
        %v315 = vunpack.c.l.b16 %v277
        %v316 = vunpack.c.l.b16 %v278
        %v317 = vunpack.c.l.b16 %v279
        %v318 = vunpack.c.l.b16 %v280
        %v319 = vunpack.c.l.b16 %v281
        %v320 = vunpack.c.l.b16 %v282
        %v321 = vpack.c.b16 %v306, %v305
        %v322 = vpack.c.b16 %v308, %v307
        %v323 = vpack.c.b16 %v310, %v309
        %v324 = vpack.c.b16 %v312, %v311
        %v325 = vpack.c.b16 %v314, %v313
        %v326 = vpack.c.b16 %v316, %v315
        %v327 = vpack.c.b16 %v318, %v317
        %v328 = vpack.c.b16 %v320, %v319
        %337 = vmatprep.subr.bf16.mxu0 0
        %338 = vmatpush1.bf16.msra.mxu0 %v328
        %339 = vmatprep.subr.bf16.mxu0 0
        %340 = vmatpush1.bf16.msra.mxu0 %v327
        %341 = vmatprep.subr.bf16.mxu0 0
        %342 = vmatpush1.bf16.msra.mxu0 %v326
        %343 = vmatprep.subr.bf16.mxu0 0
        %344 = vmatpush1.bf16.msra.mxu0 %v325
        %345 = vmatprep.subr.bf16.mxu0 0
        %346 = vmatpush1.bf16.msra.mxu0 %v324
        %347 = vmatprep.subr.bf16.mxu0 0
        %348 = vmatpush1.bf16.msra.mxu0 %v323
        %349 = vmatprep.subr.bf16.mxu0 0
        %350 = vmatpush1.bf16.msra.mxu0 %v322
        %351 = vmatprep.subr.bf16.mxu0 0
        %352 = vmatpush1.bf16.msra.mxu0 %v321
        %353 = vmatprep.subr.bf16.mxu0 0
        %354 = vmatpush2.bf16.msra.mxu0 0
        %355 = vmatprep.subr.bf16.mxu0 0
        %356 = vmatpush2.bf16.msra.mxu0 0
        %357 = vmatprep.subr.bf16.mxu0 0
        %358 = vmatpush2.bf16.msra.mxu0 0
        %359 = vmatprep.subr.bf16.mxu0 0
        %360 = vmatpush2.bf16.msra.mxu0 0
        %361 = vmatprep.subr.bf16.mxu0 0
        %362 = vmatpush2.bf16.msra.mxu0 0
        %363 = vmatprep.subr.bf16.mxu0 0
        %364 = vmatpush2.bf16.msra.mxu0 0
        %365 = vmatprep.subr.bf16.mxu0 0
        %366 = vmatpush2.bf16.msra.mxu0 0
        %367 = vmatprep.subr.bf16.mxu0 0
        %368 = vmatpush2.bf16.msra.mxu0 0
        %369 = vmatprep.mubr.bf16.mxu0 0
        %370 = vmatmul.mubr.bf16.gmra.mxu0 %v288
        %v371 = vpop.f32.mrf.mxu0
        %v372 = vadd.f32 0.0, %v371
        %v373 = vpop.f32.mrf.mxu0
        %v374 = vpop.f32.mrf.mxu0
        %v375 = vpop.f32.mrf.mxu0
        %376 = vdwg.mxu0
        %v377 = vadd.f32 %v287, %v372
        %v378 = vtanh.pop %v377
        %v379 = vstv %s284
        %vm380 = vcmp.lt.s32.totalorder %v379, %v283
        %v381 = vsel %vm380, 1, 0
        %382 = vset.pattern.permute.xlu0 0
        %383 = vperm.xlu0 %382, %v381
        %v384 = vpop.permute.xlu0 %383
        %vm385 = vcmp.eq.s32.totalorder %v384, 1
        %v386 = vsel %vm385, %v378, %v285
        %s387 = scalar_lea.vmem %s230, 4 [#allocation3]
        %v388 = vld [vmem:[%s387] sm:$0xf]
        %v389 = vunpack.c.l.bf16 %v388
        %v390 = vpack.c.bf16 %v386, %v386
        %391 = vmatprep.subr.bf16.mxu0 0
        %392 = vmatpush1.bf16.msra.mxu0 %v328
        %393 = vmatprep.subr.bf16.mxu0 0
        %394 = vmatpush1.bf16.msra.mxu0 %v327
        %395 = vmatprep.subr.bf16.mxu0 0
        %396 = vmatpush1.bf16.msra.mxu0 %v326
        %397 = vmatprep.subr.bf16.mxu0 0
        %398 = vmatpush1.bf16.msra.mxu0 %v325
        %399 = vmatprep.subr.bf16.mxu0 0
        %400 = vmatpush1.bf16.msra.mxu0 %v324
        %401 = vmatprep.subr.bf16.mxu0 0
        %402 = vmatpush1.bf16.msra.mxu0 %v323
        %403 = vmatprep.subr.bf16.mxu0 0
        %404 = vmatpush1.bf16.msra.mxu0 %v322
        %405 = vmatprep.subr.bf16.mxu0 0
        %406 = vmatpush1.bf16.msra.mxu0 %v321
        %407 = vmatprep.subr.bf16.mxu0 0
        %408 = vmatpush2.bf16.msra.mxu0 0
        %409 = vmatprep.subr.bf16.mxu0 0
        %410 = vmatpush2.bf16.msra.mxu0 0
        %411 = vmatprep.subr.bf16.mxu0 0
        %412 = vmatpush2.bf16.msra.mxu0 0
        %413 = vmatprep.subr.bf16.mxu0 0
        %414 = vmatpush2.bf16.msra.mxu0 0
        %415 = vmatprep.subr.bf16.mxu0 0
        %416 = vmatpush2.bf16.msra.mxu0 0
        %417 = vmatprep.subr.bf16.mxu0 0
        %418 = vmatpush2.bf16.msra.mxu0 0
        %419 = vmatprep.subr.bf16.mxu0 0
        %420 = vmatpush2.bf16.msra.mxu0 0
        %421 = vmatprep.subr.bf16.mxu0 0
        %422 = vmatpush2.bf16.msra.mxu0 0
        %423 = vmatprep.mubr.bf16.mxu0 0
        %424 = vmatmul.mubr.bf16.gmra.mxu0 %v390
        %v425 = vpop.f32.mrf.mxu0
        %v426 = vadd.f32 0.0, %v425
        %v427 = vpop.f32.mrf.mxu0
        %v428 = vpop.f32.mrf.mxu0
        %v429 = vpop.f32.mrf.mxu0
        %430 = vdwg.mxu0
        %v431 = vadd.f32 %v389, %v426
        %v432 = vtanh.pop %v431
        %s433 = sadd.s32 %s284, 1
        %v434 = vstv %s433
        %vm435 = vcmp.lt.s32.totalorder %v434, %v283
        %v436 = vsel %vm435, 1, 0
        %437 = vset.pattern.permute.xlu0 0
        %438 = vperm.xlu0 %437, %v436
        %v439 = vpop.permute.xlu0 %438
        %vm440 = vcmp.eq.s32.totalorder %v439, 1
        %v441 = vsel %vm440, %v432, %v386
        %s442 = scalar_lea.vmem %s230, 8 [#allocation3]
        %v443 = vld [vmem:[%s442] sm:$0xf]
        %v444 = vunpack.c.l.bf16 %v443
        %v445 = vpack.c.bf16 %v441, %v441
        %446 = vmatprep.subr.bf16.mxu0 0
        %447 = vmatpush1.bf16.msra.mxu0 %v328
        %448 = vmatprep.subr.bf16.mxu0 0
        %449 = vmatpush1.bf16.msra.mxu0 %v327
        %450 = vmatprep.subr.bf16.mxu0 0
        %451 = vmatpush1.bf16.msra.mxu0 %v326
        %452 = vmatprep.subr.bf16.mxu0 0
        %453 = vmatpush1.bf16.msra.mxu0 %v325
        %454 = vmatprep.subr.bf16.mxu0 0
        %455 = vmatpush1.bf16.msra.mxu0 %v324
        %456 = vmatprep.subr.bf16.mxu0 0
        %457 = vmatpush1.bf16.msra.mxu0 %v323
        %458 = vmatprep.subr.bf16.mxu0 0
        %459 = vmatpush1.bf16.msra.mxu0 %v322
        %460 = vmatprep.subr.bf16.mxu0 0
        %461 = vmatpush1.bf16.msra.mxu0 %v321
        %462 = vmatprep.subr.bf16.mxu0 0
        %463 = vmatpush2.bf16.msra.mxu0 0
        %464 = vmatprep.subr.bf16.mxu0 0
        %465 = vmatpush2.bf16.msra.mxu0 0
        %466 = vmatprep.subr.bf16.mxu0 0
        %467 = vmatpush2.bf16.msra.mxu0 0
        %468 = vmatprep.subr.bf16.mxu0 0
        %469 = vmatpush2.bf16.msra.mxu0 0
        %470 = vmatprep.subr.bf16.mxu0 0
        %471 = vmatpush2.bf16.msra.mxu0 0
        %472 = vmatprep.subr.bf16.mxu0 0
        %473 = vmatpush2.bf16.msra.mxu0 0
        %474 = vmatprep.subr.bf16.mxu0 0
        %475 = vmatpush2.bf16.msra.mxu0 0
        %476 = vmatprep.subr.bf16.mxu0 0
        %477 = vmatpush2.bf16.msra.mxu0 0
        %478 = vmatprep.mubr.bf16.mxu0 0
        %479 = vmatmul.mubr.bf16.gmra.mxu0 %v445
        %v480 = vpop.f32.mrf.mxu0
        %v481 = vadd.f32 0.0, %v480
        %v482 = vpop.f32.mrf.mxu0
        %v483 = vpop.f32.mrf.mxu0
        %v484 = vpop.f32.mrf.mxu0
        %485 = vdwg.mxu0
        %v486 = vadd.f32 %v444, %v481
        %v487 = vtanh.pop %v486
        %s488 = sadd.s32 %s284, 2
        %v489 = vstv %s488
        %vm490 = vcmp.lt.s32.totalorder %v489, %v283
        %v491 = vsel %vm490, 1, 0
        %492 = vset.pattern.permute.xlu0 0
        %493 = vperm.xlu0 %492, %v491
        %v494 = vpop.permute.xlu0 %493
        %vm495 = vcmp.eq.s32.totalorder %v494, 1
        %v496 = vsel %vm495, %v487, %v441
        %s497 = scalar_lea.vmem %s230, 12 [#allocation3]
        %v498 = vld [vmem:[%s497] sm:$0xf]
        %v499 = vunpack.c.l.bf16 %v498
        %v500 = vpack.c.bf16 %v496, %v496
        %501 = vmatprep.subr.bf16.mxu0 0
        %502 = vmatpush1.bf16.msra.mxu0 %v328
        %503 = vmatprep.subr.bf16.mxu0 0
        %504 = vmatpush1.bf16.msra.mxu0 %v327
        %505 = vmatprep.subr.bf16.mxu0 0
        %506 = vmatpush1.bf16.msra.mxu0 %v326
        %507 = vmatprep.subr.bf16.mxu0 0
        %508 = vmatpush1.bf16.msra.mxu0 %v325
        %509 = vmatprep.subr.bf16.mxu0 0
        %510 = vmatpush1.bf16.msra.mxu0 %v324
        %511 = vmatprep.subr.bf16.mxu0 0
        %512 = vmatpush1.bf16.msra.mxu0 %v323
        %513 = vmatprep.subr.bf16.mxu0 0
        %514 = vmatpush1.bf16.msra.mxu0 %v322
        %515 = vmatprep.subr.bf16.mxu0 0
        %516 = vmatpush1.bf16.msra.mxu0 %v321
        %517 = vmatprep.subr.bf16.mxu0 0
        %518 = vmatpush2.bf16.msra.mxu0 0
        %519 = vmatprep.subr.bf16.mxu0 0
        %520 = vmatpush2.bf16.msra.mxu0 0
        %521 = vmatprep.subr.bf16.mxu0 0
        %522 = vmatpush2.bf16.msra.mxu0 0
        %523 = vmatprep.subr.bf16.mxu0 0
        %524 = vmatpush2.bf16.msra.mxu0 0
        %525 = vmatprep.subr.bf16.mxu0 0
        %526 = vmatpush2.bf16.msra.mxu0 0
        %527 = vmatprep.subr.bf16.mxu0 0
        %528 = vmatpush2.bf16.msra.mxu0 0
        %529 = vmatprep.subr.bf16.mxu0 0
        %530 = vmatpush2.bf16.msra.mxu0 0
        %531 = vmatprep.subr.bf16.mxu0 0
        %532 = vmatpush2.bf16.msra.mxu0 0
        %533 = vmatprep.mubr.bf16.mxu0 0
        %534 = vmatmul.mubr.bf16.gmra.mxu0 %v500
        %v535 = vpop.f32.mrf.mxu0
        %v536 = vadd.f32 0.0, %v535
        %v537 = vpop.f32.mrf.mxu0
        %v538 = vpop.f32.mrf.mxu0
        %v539 = vpop.f32.mrf.mxu0
        %540 = vdwg.mxu0
        %v541 = vadd.f32 %v499, %v536
        %v542 = vtanh.pop %v541
        %s543 = sadd.s32 %s284, 3
        %v544 = vstv %s543
        %vm545 = vcmp.lt.s32.totalorder %v544, %v283
        %v546 = vsel %vm545, 1, 0
        %547 = vset.pattern.permute.xlu0 0
        %548 = vperm.xlu0 %547, %v546
        %v549 = vpop.permute.xlu0 %548
        %vm550 = vcmp.eq.s32.totalorder %v549, 1
        %v551 = vsel %vm550, %v542, %v496
        %552 = vst [vmem:[#allocation2] sm:$0xff] %v551
        %p553 = scmp.eq.s32.totalorder %s21, 1
        // Predicated region
        $region57: #{tpu_custom_call.1} parent=39 // pred_check
          %p554 = pneg %p553
        $region58: #{tpu_custom_call.1} parent=39 // pred_check_branch
          %556 = sbr.rel (%p554) target = $region60
        $region59: #{tpu_custom_call.1} parent=39 // pred_region
          %v557 = vld [vmem:[#allocation2] sm:$0xff]
          %v558 = vld [vmem:[#allocation8] sm:$0xff]
          %v559 = vld [vmem:[#allocation8 + $0x8] sm:$0xff]
          %v560 = vld [vmem:[#allocation8 + $0x10] sm:$0xff]
          %v561 = vld [vmem:[#allocation8 + $0x18] sm:$0xff]
          %v562 = vld [vmem:[#allocation8 + $0x20] sm:$0xff]
          %v563 = vld [vmem:[#allocation8 + $0x28] sm:$0xff]
          %v564 = vld [vmem:[#allocation8 + $0x30] sm:$0xff]
          %v565 = vld [vmem:[#allocation8 + $0x38] sm:$0xff]
          %v566 = vld [vmem:[#allocation8 + $0x40] sm:$0xff]
          %v567 = vld [vmem:[#allocation8 + $0x48] sm:$0xff]
          %v568 = vld [vmem:[#allocation8 + $0x50] sm:$0xff]
          %v569 = vld [vmem:[#allocation8 + $0x58] sm:$0xff]
          %v570 = vld [vmem:[#allocation8 + $0x60] sm:$0xff]
          %v571 = vld [vmem:[#allocation8 + $0x68] sm:$0xff]
          %v572 = vld [vmem:[#allocation8 + $0x70] sm:$0xff]
          %v573 = vld [vmem:[#allocation8 + $0x78] sm:$0xff]
          %v574 = vld [vmem:[%s4] sm:$0x1]
          %v576 = vlaneseq
          %v577 = vshrl.u32 %v576, 7
          %v578 = vsub.s32 0, %v577
          %v579 = vrot.slane %v574, %v578
          %581 = vmatprep.subr.mxu0 0.0
          %582 = vmatpush1.msra.mxu0 %v573
          %583 = vmatprep.subr.mxu0 0.0
          %584 = vmatpush1.msra.mxu0 %v572
          %585 = vmatprep.subr.mxu0 0.0
          %586 = vmatpush1.msra.mxu0 %v571
          %587 = vmatprep.subr.mxu0 0.0
          %588 = vmatpush1.msra.mxu0 %v570
          %589 = vmatprep.subr.mxu0 0.0
          %590 = vmatpush1.msra.mxu0 %v569
          %591 = vmatprep.subr.mxu0 0.0
          %592 = vmatpush1.msra.mxu0 %v568
          %593 = vmatprep.subr.mxu0 0.0
          %594 = vmatpush1.msra.mxu0 %v567
          %595 = vmatprep.subr.mxu0 0.0
          %596 = vmatpush1.msra.mxu0 %v566
          %597 = vmatprep.subr.mxu0 0.0
          %598 = vmatpush1.msra.mxu0 %v565
          %599 = vmatprep.subr.mxu0 0.0
          %600 = vmatpush1.msra.mxu0 %v564
          %601 = vmatprep.subr.mxu0 0.0
          %602 = vmatpush1.msra.mxu0 %v563
          %603 = vmatprep.subr.mxu0 0.0
          %604 = vmatpush1.msra.mxu0 %v562
          %605 = vmatprep.subr.mxu0 0.0
          %606 = vmatpush1.msra.mxu0 %v561
          %607 = vmatprep.subr.mxu0 0.0
          %608 = vmatpush1.msra.mxu0 %v560
          %609 = vmatprep.subr.mxu0 0.0
          %610 = vmatpush1.msra.mxu0 %v559
          %611 = vmatprep.subr.mxu0 0.0
          %612 = vmatpush1.msra.mxu0 %v558
          %613 = vmatprep.subr.mxu0 0.0
          %614 = vmatpush2.msra.mxu0 0.0
          %615 = vmatprep.subr.mxu0 0.0
          %616 = vmatpush2.msra.mxu0 0.0
          %617 = vmatprep.subr.mxu0 0.0
          %618 = vmatpush2.msra.mxu0 0.0
          %619 = vmatprep.subr.mxu0 0.0
          %620 = vmatpush2.msra.mxu0 0.0
          %621 = vmatprep.subr.mxu0 0.0
          %622 = vmatpush2.msra.mxu0 0.0
          %623 = vmatprep.subr.mxu0 0.0
          %624 = vmatpush2.msra.mxu0 0.0
          %625 = vmatprep.subr.mxu0 0.0
          %626 = vmatpush2.msra.mxu0 0.0
          %627 = vmatprep.subr.mxu0 0.0
          %628 = vmatpush2.msra.mxu0 0.0
          %629 = vmatprep.subr.mxu0 0.0
          %630 = vmatpush2.msra.mxu0 0.0
          %631 = vmatprep.subr.mxu0 0.0
          %632 = vmatpush2.msra.mxu0 0.0
          %633 = vmatprep.subr.mxu0 0.0
          %634 = vmatpush2.msra.mxu0 0.0
          %635 = vmatprep.subr.mxu0 0.0
          %636 = vmatpush2.msra.mxu0 0.0
          %637 = vmatprep.subr.mxu0 0.0
          %638 = vmatpush2.msra.mxu0 0.0
          %639 = vmatprep.subr.mxu0 0.0
          %640 = vmatpush2.msra.mxu0 0.0
          %641 = vmatprep.subr.mxu0 0.0
          %642 = vmatpush2.msra.mxu0 0.0
          %643 = vmatprep.subr.mxu0 0.0
          %644 = vmatpush2.msra.mxu0 0.0
          %645 = vmatprep.mubr.f32.mxu0 0.0
          %646 = vmatmul.mubr.f32.gmra.mxu0 %v557
          %v647 = vpop.f32.mrf.mxu0
          %v648 = vadd.f32 %v579, %v647
          %v649 = vpop.f32.mrf.mxu0
          %650 = vdwg.mxu0
          %651 = vst [vmem:[#allocation9] sm:$0xff] %v648
        $region60: #{tpu_custom_call.1} parent=39 // pred_fallthru
          _
        // Predicated region
        $region61: #{tpu_custom_call.1} parent=39 // pred_check
          %p652 = pneg %p144
        $region62: #{tpu_custom_call.1} parent=39 // pred_check_branch
          %654 = sbr.rel (%p652) target = $region64
        $region63: #{tpu_custom_call.1} parent=39 // pred_region
          %s656 = ssub.s32 128, 128
          %657 = vsyncadd [#allocation5], %s656
          %s659 = sshll.u32 [#allocation9], 4
          %s660 = int_to_ptr.vmem [resolvable:$true] %s659
          %662 = dma.vmem_to_hbm [thread:$0]  %s660, 128, %s5, [#allocation5]
        $region64: #{tpu_custom_call.1} parent=39 // pred_fallthru
          _
        // Predicated region
        $region65: #{tpu_custom_call.1} parent=39 // pred_check
          %p663 = pneg %p144
        $region66: #{tpu_custom_call.1} parent=39 // pred_check_branch
          %665 = sbr.rel (%p663) target = $region68
        $region67: #{tpu_custom_call.1} parent=39 // pred_region
          %666 = dma.done [#allocation5], 128
        $region68: #{tpu_custom_call.1} parent=39 // pred_fallthru
          _
      $region40: #{tpu_custom_call.1} parent=5 // pred_fallthru
        _
      %p667 = scmp.le.s32.totalorder 2, %s16
      // Predicated region
      $region69: #{tpu_custom_call.1} parent=5 // pred_check
        %p668 = pneg %p667
      $region70: #{tpu_custom_call.1} parent=5 // pred_check_branch
        %670 = sbr.rel (%p668) target = $region72
      $region71: #{tpu_custom_call.1} parent=5 // pred_region
        %s671 = ssub.s32 %s16, 2
      $region72: #{tpu_custom_call.1} parent=5 // pred_fallthru
        _
    $region6: #{tpu_custom_call.1} parent=1 // loop_footer
      %s20 = sadd.s32 1, %s16
    $region7: #{tpu_custom_call.1} parent=1 // loop_footer_branch
      %15 = sbr.rel target = $region3
    $region8: #{tpu_custom_call.1} parent=1 // loop_exit
      _
    %672 = vsyncpa [#allocation4], 1
    %s673 = scalar_lea.sflag [#allocation4], 1
    %674 = vsyncpa %s673, 1
    %675 = vsyncpa [#allocation7], 1
    %676 = vsyncpa [#allocation5], 1
    %s677 = scalar_lea.sflag [#allocation5], 1
    %678 = vsyncpa %s677, 1

</llo_original>
